<compile_context>
chip_gen: v7x
topology: tpu7x:2x2x1
jax: 0.10.0
libtpu: 0.0.40
codegen_flags: <defaults>
</compile_context>

<pallas_src>
import functools
import math

import jax
import jax.numpy as jnp
from jax.experimental import pallas as pl
from jax.experimental.pallas import tpu as pltpu


def _round_up(x, m):
    return ((x + m - 1) // m) * m


def _preferred_pack():
    """2-way row packing (128-wide) for 128x128-MXU chips, 4-way (256-wide)
    for v6e/v7x (2x256x256 MXU).  Correctness does not depend on this."""
    try:
        kind = jax.devices()[0].device_kind.lower()
    except Exception:
        return 2
    return 4 if ("v6" in kind or "v7" in kind) else 2


def _k_net_kernel(x_ref, w_ref, o_ref):
    # x_ref: (tile_r, K), w_ref: (K, N) -> o_ref: (tile_r, N)
    o_ref[...] = jnp.dot(
        x_ref[...], w_ref[...], preferred_element_type=jnp.float32
    ).astype(o_ref.dtype)


def _choose_tile(rows_p, row_tile):
    """Row-tile (in packed rows). Full-extent block for tiny inputs; otherwise
    a multiple of 8 capped so the grid has >= 2 steps (v7x megacore)."""
    if rows_p < 16:
        return rows_p  # equals full array dim -> always a legal block shape
    target = min(row_tile, _round_up(pl.cdiv(rows_p, 2), 8))
    return max(8, target)


@functools.partial(jax.jit, static_argnames=("pack", "row_tile"))
def _k_net_forward_impl(data, weight, *, pack, row_tile):
    n_out, n_in = weight.shape
    orig_lead = data.shape[:-1]
    assert data.shape[-1] == n_in

    # Flatten leading dims into one streamed "rows" axis (whole trajectory /
    # batch in ONE launch), then pack `pack` consecutive rows per lane-row.
    x = data.reshape(-1, n_in)
    rows = x.shape[0]
    assert rows % pack == 0
    rows_p = rows // pack
    k_dim = n_in * pack
    n_dim = n_out * pack
    x = x.reshape(rows_p, k_dim)  # free, contiguous reshape

    # Block-diagonal weight diag(W^T, ..., W^T): (K, N).  Tiny (<= 256 KiB).
    wt = weight.T.astype(data.dtype)
    w_block = wt if pack == 1 else jnp.kron(jnp.eye(pack, dtype=data.dtype), wt)

    tile_r = _choose_tile(rows_p, row_tile)
    grid = (pl.cdiv(rows_p, tile_r),)

    cost = pl.CostEstimate(
        flops=2 * rows * n_in * n_out,
        bytes_accessed=(rows * n_in + rows * n_out + k_dim * n_dim)
        * data.dtype.itemsize,
        transcendentals=0,
    )

    out = pl.pallas_call(
        _k_net_kernel,
        out_shape=jax.ShapeDtypeStruct((rows_p, n_dim), data.dtype),
        grid=grid,
        in_specs=[
            # Activations stream through, one packed-row tile per grid step.
            pl.BlockSpec((tile_r, k_dim), lambda i: (i, 0)),
            # Weight pinned to block (0, 0): loaded once, stays VMEM-resident.
            pl.BlockSpec((k_dim, n_dim), lambda i: (0, 0)),
        ],
        out_specs=pl.BlockSpec((tile_r, n_dim), lambda i: (i, 0)),
        compiler_params=pltpu.CompilerParams(
            dimension_semantics=("parallel",),  # shard row tiles across v7x TCs
        ),
        cost_estimate=cost,
    )(x, w_block)

    # Free, contiguous reshape back: (rows/pack, n_out*pack) -> (..., n_out).
    return out.reshape(orig_lead + (n_out,))


def k_net_forward(data, weight, *, row_tile=2048, pack=None):
    """Forward pass of K_Net: data @ weight.T.

    data:   (..., n_input)  activations (any number of leading dims).
    weight: (n_output, n_input)  PyTorch-layout linear weight (no bias).
    Returns (..., n_output).
    """
    if pack is None:
        pack = _preferred_pack()
    rows = math.prod(data.shape[:-1]) if data.shape[:-1] else 1
    # Packing needs rows % pack == 0; degrade gracefully otherwise.
    while pack > 1 and rows % pack != 0:
        pack //= 2
    pack = max(pack, 1)
    return _k_net_forward_impl(data, weight, pack=pack, row_tile=row_tile)


def make_orthogonal_weight(key, n_output, n_input, dtype=jnp.float32):
    """Deterministic orthogonal init (stand-in for geotorch uniform sample)."""
    a = jax.random.normal(key, (n_output, n_input), dtype=jnp.float32)
    q, r = jnp.linalg.qr(a)
    s = jnp.sign(jnp.diagonal(r))
    s = jnp.where(s == 0, 1.0, s)
    q = q * s[None, :]
    return q.astype(dtype)


if __name__ == "__main__":
    # KdV 64-D feature space: n_input == n_output == 64, small batch.
    n_input = 64
    n_output = 64
    batch = 8

    key = jax.random.PRNGKey(0)
    k_w, k_x = jax.random.split(key)

    weight = make_orthogonal_weight(k_w, n_output, n_input)   # (64, 64), orthogonal
    data = jax.random.normal(k_x, (batch, n_input), dtype=jnp.float32)

    out = jax.block_until_ready(k_net_forward(data, weight))
    ref = data @ weight.T
    assert out.shape == (batch, n_output)
    assert jnp.allclose(out, ref, atol=1e-5, rtol=1e-5)

    # Amortized / multi-tile path: a "trajectory" of many timesteps in one
    # launch (weight VMEM-resident, packed rows streamed over >=2 grid steps).
    T = 100
    traj = jax.random.normal(jax.random.PRNGKey(1), (T, batch, n_input), jnp.float32)
    out_traj = jax.block_until_ready(k_net_forward(traj, weight))
    ref_traj = traj @ weight.T
    assert out_traj.shape == (T, batch, n_output)
    assert jnp.allclose(out_traj, ref_traj, atol=1e-5, rtol=1e-5)

    # Odd row count exercises the partial-block (masked writeback) path and
    # the pack fallback.
    odd = jax.random.normal(jax.random.PRNGKey(2), (37, n_input), jnp.float32)
    out_odd = jax.block_until_ready(k_net_forward(odd, weight, pack=1))
    assert jnp.allclose(out_odd, odd @ weight.T, atol=1e-5, rtol=1e-5)

    print("KERNEL_OK")
</pallas_src>

<mosaic_0001>
module attributes {stable_mosaic.version = 11 : i64} {
  func.func @_k_net_kernel(%arg0: i32, %arg1: memref<4x128xf32, #tpu.memory_space<vmem>>, %arg2: memref<128x128xf32, #tpu.memory_space<vmem>>, %arg3: memref<4x128xf32, #tpu.memory_space<vmem>>) attributes {dimension_semantics = [#tpu.dimension_semantics<parallel>], iteration_bounds = array<i64: 1>, scalar_prefetch = 0 : i64, scratch_operands = 0 : i64, tpu.core_type = #tpu.core_type<tc>, window_params = [{transform_indices = @transform_0, window_bounds = array<i64: 4, 128>}, {pipeline_mode = #tpu.pipeline_mode<synchronous>, transform_indices = @transform_1, window_bounds = array<i64: 128, 128>}, {transform_indices = @transform_2, window_bounds = array<i64: 4, 128>}]} {
    %c0 = arith.constant 0 : index
    %c0_0 = arith.constant 0 : index
    %0 = vector.load %arg1[%c0, %c0_0] : memref<4x128xf32, #tpu.memory_space<vmem>>, vector<4x128xf32>
    %c0_1 = arith.constant 0 : index
    %c0_2 = arith.constant 0 : index
    %1 = vector.load %arg2[%c0_1, %c0_2] : memref<128x128xf32, #tpu.memory_space<vmem>>, vector<128x128xf32>
    %cst = arith.constant dense<0.000000e+00> : vector<4x128xf32>
    %2 = tpu.matmul %0, %1, %cst {dimension_numbers = #tpu.dot_dimension_numbers<[1], [0], [0], [1], [0, 0, 1, 1], [], []>} : vector<4x128xf32>, vector<128x128xf32>, vector<4x128xf32> -> vector<4x128xf32>
    %c0_3 = arith.constant 0 : index
    %c0_4 = arith.constant 0 : index
    %3 = vector.load %arg3[%c0_3, %c0_4] : memref<4x128xf32, #tpu.memory_space<vmem>>, vector<4x128xf32>
    tpu.vector_store %arg3[%c0_3, %c0_4], %2 {strides = array<i32>} : memref<4x128xf32, #tpu.memory_space<vmem>>, vector<4x128xf32>,
    return
  }
  func.func @transform_0(%arg0: i32) -> (i32, i32) {
    %c0_i32 = arith.constant 0 : i32
    %c0_i32_0 = arith.constant 0 : i32
    return %arg0, %c0_i32 : i32, i32
  }
  func.func @transform_1(%arg0: i32) -> (i32, i32) {
    %c0_i32 = arith.constant 0 : i32
    %c0_i32_0 = arith.constant 0 : i32
    %c0_i32_1 = arith.constant 0 : i32
    return %c0_i32, %c0_i32_0 : i32, i32
  }
  func.func @transform_2(%arg0: i32) -> (i32, i32) {
    %c0_i32 = arith.constant 0 : i32
    %c0_i32_0 = arith.constant 0 : i32
    return %arg0, %c0_i32 : i32, i32
  }
}

</mosaic_0001>

<llo_original>
// kernel: _k_net_forward_impl.1
$region0: #{_k_net_forward_impl.1}
  #allocation0 [shape = 'u32[]', space=smem, size = 0x4, offset = 0x4, fixed_abs, tag = 'smem constant byte address 0x4 - core index']
  #allocation1 [shape = 'u32[144,128]{1,0:T(1,128)}', space=vmem, size = 0x12000, scoped, tag = 'internal scratch']
  %s0 = inlined_call_operand.vmem [shape: f32[4,128], index: 0, kind: input, shape index: {}]
  %s1 = inlined_call_operand.vmem [shape: f32[128,128], index: 1, kind: input, shape index: {}]
  %s2 = inlined_call_operand.vmem [shape: f32[4,128], index: 2, kind: output, shape index: {}]
  %s3 = sld [smem:[#allocation0]]
  $region18: #{_k_net_forward_impl.1} parent=0
    _
  %s5 = ssub.s32 1, %s3
  %s6 = scalar_select 0, %s5, %s3
  // Predicated region
  $region2: #{_k_net_forward_impl.1} parent=0 // pred_check
    _
  $region3: #{_k_net_forward_impl.1} parent=0 // pred_check_branch
    %8 = sbr.rel (0) target = $region5
  $region4: #{_k_net_forward_impl.1} parent=0 // pred_region
    _
  $region5: #{_k_net_forward_impl.1} parent=0 // pred_fallthru
    _
  // Predicated region
  $region6: #{_k_net_forward_impl.1} parent=0 // pred_check
    _
  $region7: #{_k_net_forward_impl.1} parent=0 // pred_check_branch
    %10 = sbr.rel (0) target = $region9
  $region8: #{_k_net_forward_impl.1} parent=0 // pred_region
    _
  $region9: #{_k_net_forward_impl.1} parent=0 // pred_fallthru
    _
  %v11 = vld [vmem:[%s0] sm:$0xf]
  %v12 = vld [vmem:[%s1] sm:$0xff]
  %v13 = vld [vmem:[%s1 + $0x8] sm:$0xff]
  %v14 = vld [vmem:[%s1 + $0x10] sm:$0xff]
  %v15 = vld [vmem:[%s1 + $0x18] sm:$0xff]
  %v16 = vld [vmem:[%s1 + $0x20] sm:$0xff]
  %v17 = vld [vmem:[%s1 + $0x28] sm:$0xff]
  %v18 = vld [vmem:[%s1 + $0x30] sm:$0xff]
  %v19 = vld [vmem:[%s1 + $0x38] sm:$0xff]
  %v20 = vld [vmem:[%s1 + $0x40] sm:$0xff]
  %v21 = vld [vmem:[%s1 + $0x48] sm:$0xff]
  %v22 = vld [vmem:[%s1 + $0x50] sm:$0xff]
  %v23 = vld [vmem:[%s1 + $0x58] sm:$0xff]
  %v24 = vld [vmem:[%s1 + $0x60] sm:$0xff]
  %v25 = vld [vmem:[%s1 + $0x68] sm:$0xff]
  %v26 = vld [vmem:[%s1 + $0x70] sm:$0xff]
  %v27 = vld [vmem:[%s1 + $0x78] sm:$0xff]
  %28 = vmatprep.subr.mxu0 0.0
  %29 = vmatpush1.msra.mxu0 %v12
  %30 = vmatprep.subr.mxu0 0.0
  %31 = vmatpush1.msra.mxu0 %v13
  %32 = vmatprep.subr.mxu0 0.0
  %33 = vmatpush1.msra.mxu0 %v14
  %34 = vmatprep.subr.mxu0 0.0
  %35 = vmatpush1.msra.mxu0 %v15
  %36 = vmatprep.subr.mxu0 0.0
  %37 = vmatpush1.msra.mxu0 %v16
  %38 = vmatprep.subr.mxu0 0.0
  %39 = vmatpush1.msra.mxu0 %v17
  %40 = vmatprep.subr.mxu0 0.0
  %41 = vmatpush1.msra.mxu0 %v18
  %42 = vmatprep.subr.mxu0 0.0
  %43 = vmatpush1.msra.mxu0 %v19
  %44 = vmatprep.subr.mxu0 0.0
  %45 = vmatpush1.msra.mxu0 %v20
  %46 = vmatprep.subr.mxu0 0.0
  %47 = vmatpush1.msra.mxu0 %v21
  %48 = vmatprep.subr.mxu0 0.0
  %49 = vmatpush1.msra.mxu0 %v22
  %50 = vmatprep.subr.mxu0 0.0
  %51 = vmatpush1.msra.mxu0 %v23
  %52 = vmatprep.subr.mxu0 0.0
  %53 = vmatpush1.msra.mxu0 %v24
  %54 = vmatprep.subr.mxu0 0.0
  %55 = vmatpush1.msra.mxu0 %v25
  %56 = vmatprep.subr.mxu0 0.0
  %57 = vmatpush1.msra.mxu0 %v26
  %58 = vmatprep.subr.mxu0 0.0
  %59 = vmatpush1.msra.mxu0 %v27
  %60 = vmatprep.subr.mxu0 0.0
  %61 = vmatpush1.msra.mxu0 0.0
  %62 = vmatprep.subr.mxu0 0.0
  %63 = vmatpush1.msra.mxu0 0.0
  %64 = vmatprep.subr.mxu0 0.0
  %65 = vmatpush1.msra.mxu0 0.0
  %66 = vmatprep.subr.mxu0 0.0
  %67 = vmatpush1.msra.mxu0 0.0
  %68 = vmatprep.subr.mxu0 0.0
  %69 = vmatpush1.msra.mxu0 0.0
  %70 = vmatprep.subr.mxu0 0.0
  %71 = vmatpush1.msra.mxu0 0.0
  %72 = vmatprep.subr.mxu0 0.0
  %73 = vmatpush1.msra.mxu0 0.0
  %74 = vmatprep.subr.mxu0 0.0
  %75 = vmatpush1.msra.mxu0 0.0
  %76 = vmatprep.subr.mxu0 0.0
  %77 = vmatpush1.msra.mxu0 0.0
  %78 = vmatprep.subr.mxu0 0.0
  %79 = vmatpush1.msra.mxu0 0.0
  %80 = vmatprep.subr.mxu0 0.0
  %81 = vmatpush1.msra.mxu0 0.0
  %82 = vmatprep.subr.mxu0 0.0
  %83 = vmatpush1.msra.mxu0 0.0
  %84 = vmatprep.subr.mxu0 0.0
  %85 = vmatpush1.msra.mxu0 0.0
  %86 = vmatprep.subr.mxu0 0.0
  %87 = vmatpush1.msra.mxu0 0.0
  %88 = vmatprep.subr.mxu0 0.0
  %89 = vmatpush1.msra.mxu0 0.0
  %90 = vmatprep.subr.mxu0 0.0
  %91 = vmatpush1.msra.mxu0 0.0
  %92 = vmatprep.mubr.f32.mxu0 0.0
  %93 = vmatmul.mubr.f32.gmra.mrb[0].mxu0 %v11
  %v94 = vpop.f32.mrb[0].mxu0
  %v95 = vadd.f32 0.0, %v94
  %v96 = vpop.f32.mrb[0].mxu0
  %97 = vdwg.mxu0
  %98 = vst [vmem:[%s2] sm:$0xf] %v95
  // Predicated region
  $region10: #{_k_net_forward_impl.1} parent=0 // pred_check
    _
  $region11: #{_k_net_forward_impl.1} parent=0 // pred_check_branch
    %100 = sbr.rel (0) target = $region13
  $region12: #{_k_net_forward_impl.1} parent=0 // pred_region
    _
  $region13: #{_k_net_forward_impl.1} parent=0 // pred_fallthru
    _
  // Predicated region
  $region14: #{_k_net_forward_impl.1} parent=0 // pred_check
    _
  $region15: #{_k_net_forward_impl.1} parent=0 // pred_check_branch
    %102 = sbr.rel (0) target = $region17
  $region16: #{_k_net_forward_impl.1} parent=0 // pred_region
    _
  $region17: #{_k_net_forward_impl.1} parent=0 // pred_fallthru
    _

</llo_original>
